<compile_context>
chip_gen: v7x
topology: tpu7x:2x2x1
jax: 0.10.0
libtpu: 0.0.40
codegen_flags: <defaults>
</compile_context>

<pallas_src>
import jax
import jax.numpy as jnp
from jax import lax
from jax.experimental import pallas as pl
from jax.experimental.pallas import tpu as pltpu

LN_EPS = 1e-5          # nn.LayerNorm default
LEAKY_SLOPE = 0.01     # nn.LeakyReLU default


def _leaky_relu(x):
    return jnp.where(x > 0, x, LEAKY_SLOPE * x)


def _layer_norm(x, gamma, beta):
    # Two independent cross-lane reductions (can overlap on the XLUs); var = E[x^2] - mu^2.
    inv_n = 1.0 / x.shape[-1]
    s1 = jnp.sum(x, axis=-1, keepdims=True)
    s2 = jnp.sum(x * x, axis=-1, keepdims=True)
    mu = s1 * inv_n
    var = s2 * inv_n - mu * mu
    return (x - mu) * lax.rsqrt(var + LN_EPS) * gamma + beta


def _layer_norm_ref(x, gamma, beta):
    mu = jnp.mean(x, axis=-1, keepdims=True)
    var = jnp.mean((x - mu) ** 2, axis=-1, keepdims=True)
    return (x - mu) * lax.rsqrt(var + LN_EPS) * gamma + beta


def _round_up(x, m):
    return ((x + m - 1) // m) * m


def _cdiv(a, b):
    return -(-a // b)


def mlp_class_kernel(x_ref, w1_ref, w2_ref, w3_ref, w4_ref, vec_ref, out_ref):
    """One batch tile.  vec_ref is an (8,128) f32 pack of all bias/gamma/beta rows:
       row 0: b1(128)  1: g1(128)  2: be1(128)
       row 3: b2(64)   4: g2(64)   5: be2(64)   (zero-padded to 128 lanes)
       row 6: b3(32)   7: b4(out_len)           (zero-padded to 128 lanes)
    """
    wd = w1_ref.dtype                       # matmul-operand dtype (bf16 default, or f32)
    out_len = out_ref.shape[-1]

    x = x_ref[...].astype(wd)               # operand cast only; x keeps native dtype in HBM
    vec = vec_ref[...]                      # (8,128) f32, one vreg

    b1, g1, be1 = vec[0:1, :], vec[1:2, :], vec[2:3, :]
    b2, g2, be2 = vec[3:4, :64], vec[4:5, :64], vec[5:6, :64]
    b3 = vec[6:7, :32]
    b4 = vec[7:8, :out_len]

    # --- mlp: Linear(feat,128) -> LayerNorm(128) -> LeakyReLU ---
    h = jnp.dot(x, w1_ref[...], preferred_element_type=jnp.float32) + b1
    h = _leaky_relu(_layer_norm(h, g1, be1))

    # --- mlp: Linear(128,64) -> LayerNorm(64) -> LeakyReLU ---
    h = jnp.dot(h.astype(wd), w2_ref[...], preferred_element_type=jnp.float32) + b2
    h = _leaky_relu(_layer_norm(h, g2, be2))

    # --- class_output: Linear(64,32) -> LeakyReLU -> Linear(32,out_len) ---
    h = jnp.dot(h.astype(wd), w3_ref[...], preferred_element_type=jnp.float32) + b3
    h = _leaky_relu(h)
    h = jnp.dot(h.astype(wd), w4_ref[...], preferred_element_type=jnp.float32) + b4

    out_ref[...] = h.astype(out_ref.dtype)  # (bt, out_len), unpadded writeback


def _pack_params(p, compute_dtype):
    """Cast weights to the operand dtype; pack all 1-D params into one (8,128) f32."""
    out_len = p["w4"].shape[1]
    assert out_len <= 128, "bias pack assumes output_len <= 128"

    def row(v):
        v = v.reshape(-1).astype(jnp.float32)
        return jnp.zeros((128,), jnp.float32).at[: v.shape[0]].set(v)

    vec = jnp.stack(
        [row(p["b1"]), row(p["g1"]), row(p["be1"]),
         row(p["b2"]), row(p["g2"]), row(p["be2"]),
         row(p["b3"]), row(p["b4"])],
        axis=0,
    )  # (8, 128) f32

    cd = compute_dtype
    return (p["w1"].astype(cd), p["w2"].astype(cd), p["w3"].astype(cd),
            p["w4"].astype(cd), vec, out_len)


def mlp_class_forward(x, params, *, batch_tile=512, compute_dtype=jnp.bfloat16):
    """x: (B, ...) -> flattened to (B, feat).  Returns (B, output_len) in f32.

    compute_dtype controls the MXU operand dtype only (default bf16 on all generations);
    accumulation, LayerNorm and activations are f32.  x is never re-materialized in HBM:
    it is flattened (a view) and cast to the operand dtype inside the kernel.
    """
    B = x.shape[0]
    x2d = x.reshape(B, -1)                 # nn.Flatten; no padding / dtype pass over x
    feat = x2d.shape[1]

    w1, w2, w3, w4, vec, out_len = _pack_params(params, compute_dtype)

    # Tile selection: multiple of 8 (sublane).  When more than one step is needed, keep
    # the step count even so both v7x TensorCores get equal work.
    bt = _round_up(min(batch_tile, max(B, 8)), 8)
    steps = _cdiv(B, bt)
    if steps > 1 and steps % 2 == 1:
        steps += 1
        bt = _round_up(_cdiv(B, steps), 8)
        steps = _cdiv(B, bt)

    def rep(shape):
        return pl.BlockSpec(shape, lambda i: (0,) * len(shape))

    out = pl.pallas_call(
        mlp_class_kernel,
        out_shape=jax.ShapeDtypeStruct((B, out_len), jnp.float32),
        grid_spec=pltpu.PrefetchScalarGridSpec(
            num_scalar_prefetch=0,
            grid=(steps,),
            in_specs=[
                pl.BlockSpec((bt, feat), lambda i: (i, 0)),   # x tile (feat = full dim)
                rep(w1.shape), rep(w2.shape), rep(w3.shape), rep(w4.shape),
                rep(vec.shape),
            ],
            out_specs=pl.BlockSpec((bt, out_len), lambda i: (i, 0)),
        ),
        compiler_params=pltpu.CompilerParams(
            dimension_semantics=("parallel",),
        ),
    )(x2d, w1, w2, w3, w4, vec)

    return out


def init_params(key, feat_dimensions, output_len):
    """Deterministic synthetic init (PyTorch-style uniform +-1/sqrt(fan_in))."""
    ks = jax.random.split(key, 4)

    def linear(k, fan_in, fan_out):
        kw, kb = jax.random.split(k)
        bound = 1.0 / jnp.sqrt(fan_in)
        w = jax.random.uniform(kw, (fan_in, fan_out), jnp.float32, -bound, bound)
        b = jax.random.uniform(kb, (1, fan_out), jnp.float32, -bound, bound)
        return w, b

    w1, b1 = linear(ks[0], feat_dimensions, 128)
    w2, b2 = linear(ks[1], 128, 64)
    w3, b3 = linear(ks[2], 64, 32)
    w4, b4 = linear(ks[3], 32, output_len)
    return dict(
        w1=w1, b1=b1, g1=jnp.ones((1, 128), jnp.float32), be1=jnp.zeros((1, 128), jnp.float32),
        w2=w2, b2=b2, g2=jnp.ones((1, 64), jnp.float32), be2=jnp.zeros((1, 64), jnp.float32),
        w3=w3, b3=b3,
        w4=w4, b4=b4,
    )


def reference_forward(x, p):
    x = x.reshape(x.shape[0], -1).astype(jnp.float32)
    h = x @ p["w1"] + p["b1"]
    h = _leaky_relu(_layer_norm_ref(h, p["g1"], p["be1"]))
    h = h @ p["w2"] + p["b2"]
    h = _leaky_relu(_layer_norm_ref(h, p["g2"], p["be2"]))
    h = _leaky_relu(h @ p["w3"] + p["b3"])
    return h @ p["w4"] + p["b4"]


if __name__ == "__main__":
    feat_dimensions = 40
    output_len = 8
    batch = 16

    key = jax.random.PRNGKey(0)
    kx, kp = jax.random.split(key)
    x = jax.random.normal(kx, (batch, feat_dimensions), jnp.float32)
    params = init_params(kp, feat_dimensions, output_len)

    ref = reference_forward(x, params)

    # f32 MXU operands (tight tolerance, safe on every generation).
    out_f32 = jax.block_until_ready(
        mlp_class_forward(x, params, compute_dtype=jnp.float32))
    assert out_f32.shape == (batch, output_len)
    assert jnp.allclose(out_f32, ref, atol=1e-4, rtol=1e-4), "f32 mismatch vs JAX reference"

    # Default path: bf16 MXU operands, f32 accumulate / LayerNorm / activations.
    out_bf16 = jax.block_until_ready(mlp_class_forward(x, params))
    assert out_bf16.shape == (batch, output_len)
    assert jnp.allclose(out_bf16, ref, atol=5e-2, rtol=5e-2), "bf16 mismatch vs JAX reference"

    # Non-divisible batch exercises the ragged last block (no jnp.pad pass over x).
    out_rag = jax.block_until_ready(
        mlp_class_forward(x[:13], params, compute_dtype=jnp.float32))
    assert out_rag.shape == (13, output_len)
    assert jnp.allclose(out_rag, ref[:13], atol=1e-4, rtol=1e-4), "ragged-batch mismatch"

    print("KERNEL_OK")
</pallas_src>

<mosaic_0001>
module attributes {stable_mosaic.version = 11 : i64} {
  func.func @mlp_class_kernel(%arg0: i32, %arg1: memref<16x40xf32, #tpu.memory_space<vmem>>, %arg2: memref<40x128xf32, #tpu.memory_space<vmem>>, %arg3: memref<128x64xf32, #tpu.memory_space<vmem>>, %arg4: memref<64x32xf32, #tpu.memory_space<vmem>>, %arg5: memref<32x8xf32, #tpu.memory_space<vmem>>, %arg6: memref<8x128xf32, #tpu.memory_space<vmem>>, %arg7: memref<16x8xf32, #tpu.memory_space<vmem>>) attributes {dimension_semantics = [#tpu.dimension_semantics<parallel>], iteration_bounds = array<i64: 1>, scalar_prefetch = 0 : i64, scratch_operands = 0 : i64, tpu.core_type = #tpu.core_type<tc>, window_params = [{transform_indices = @transform_0, window_bounds = array<i64: 16, 40>}, {pipeline_mode = #tpu.pipeline_mode<synchronous>, transform_indices = @transform_1, window_bounds = array<i64: 40, 128>}, {pipeline_mode = #tpu.pipeline_mode<synchronous>, transform_indices = @transform_2, window_bounds = array<i64: 128, 64>}, {pipeline_mode = #tpu.pipeline_mode<synchronous>, transform_indices = @transform_3, window_bounds = array<i64: 64, 32>}, {pipeline_mode = #tpu.pipeline_mode<synchronous>, transform_indices = @transform_4, window_bounds = array<i64: 32, 8>}, {pipeline_mode = #tpu.pipeline_mode<synchronous>, transform_indices = @transform_5, window_bounds = array<i64: 8, 128>}, {transform_indices = @transform_6, window_bounds = array<i64: 16, 8>}]} {
    %c0 = arith.constant 0 : index
    %c0_0 = arith.constant 0 : index
    %0 = vector.load %arg1[%c0, %c0_0] : memref<16x40xf32, #tpu.memory_space<vmem>>, vector<16x40xf32>
    %c0_1 = arith.constant 0 : index
    %c0_2 = arith.constant 0 : index
    %1 = vector.load %arg6[%c0_1, %c0_2] : memref<8x128xf32, #tpu.memory_space<vmem>>, vector<8x128xf32>
    %2 = vector.extract_strided_slice %1 {offsets = [0, 0], sizes = [1, 128], strides = [1, 1]} : vector<8x128xf32> to vector<1x128xf32>
    %3 = vector.extract_strided_slice %1 {offsets = [1, 0], sizes = [1, 128], strides = [1, 1]} : vector<8x128xf32> to vector<1x128xf32>
    %4 = vector.extract_strided_slice %1 {offsets = [2, 0], sizes = [1, 128], strides = [1, 1]} : vector<8x128xf32> to vector<1x128xf32>
    %5 = vector.extract_strided_slice %1 {offsets = [3, 0], sizes = [1, 64], strides = [1, 1]} : vector<8x128xf32> to vector<1x64xf32>
    %6 = vector.extract_strided_slice %1 {offsets = [4, 0], sizes = [1, 64], strides = [1, 1]} : vector<8x128xf32> to vector<1x64xf32>
    %7 = vector.extract_strided_slice %1 {offsets = [5, 0], sizes = [1, 64], strides = [1, 1]} : vector<8x128xf32> to vector<1x64xf32>
    %8 = vector.extract_strided_slice %1 {offsets = [6, 0], sizes = [1, 32], strides = [1, 1]} : vector<8x128xf32> to vector<1x32xf32>
    %9 = vector.extract_strided_slice %1 {offsets = [7, 0], sizes = [1, 8], strides = [1, 1]} : vector<8x128xf32> to vector<1x8xf32>
    %c0_3 = arith.constant 0 : index
    %c0_4 = arith.constant 0 : index
    %10 = vector.load %arg2[%c0_3, %c0_4] : memref<40x128xf32, #tpu.memory_space<vmem>>, vector<40x128xf32>
    %cst = arith.constant dense<0.000000e+00> : vector<16x128xf32>
    %11 = tpu.matmul %0, %10, %cst {dimension_numbers = #tpu.dot_dimension_numbers<[1], [0], [0], [1], [0, 0, 1, 1], [], []>} : vector<16x40xf32>, vector<40x128xf32>, vector<16x128xf32> -> vector<16x128xf32>
    %12 = vector.broadcast %2 : vector<1x128xf32> to vector<16x128xf32>
    %13 = arith.addf %11, %12 : vector<16x128xf32>
    %cst_5 = arith.constant dense<0.000000e+00> : vector<16xf32>
    %14 = vector.multi_reduction <add>, %13, %cst_5 [1] : vector<16x128xf32> to vector<16xf32>
    %15 = vector.shape_cast %14 : vector<16xf32> to vector<16x1xf32>
    %16 = arith.mulf %13, %13 : vector<16x128xf32>
    %cst_6 = arith.constant dense<0.000000e+00> : vector<16xf32>
    %17 = vector.multi_reduction <add>, %16, %cst_6 [1] : vector<16x128xf32> to vector<16xf32>
    %18 = vector.shape_cast %17 : vector<16xf32> to vector<16x1xf32>
    %cst_7 = arith.constant 7.812500e-03 : f32
    %19 = vector.broadcast %cst_7 : f32 to vector<16x1xf32>
    %20 = arith.mulf %15, %19 : vector<16x1xf32>
    %cst_8 = arith.constant 7.812500e-03 : f32
    %21 = vector.broadcast %cst_8 : f32 to vector<16x1xf32>
    %22 = arith.mulf %18, %21 : vector<16x1xf32>
    %23 = arith.mulf %20, %20 : vector<16x1xf32>
    %24 = arith.subf %22, %23 : vector<16x1xf32>
    %25 = vector.broadcast %20 : vector<16x1xf32> to vector<16x128xf32>
    %26 = arith.subf %13, %25 : vector<16x128xf32>
    %cst_9 = arith.constant 9.99999974E-6 : f32
    %27 = vector.broadcast %cst_9 : f32 to vector<16x1xf32>
    %28 = arith.addf %24, %27 : vector<16x1xf32>
    %29 = math.rsqrt %28 : vector<16x1xf32>
    %30 = vector.broadcast %29 : vector<16x1xf32> to vector<16x128xf32>
    %31 = arith.mulf %26, %30 : vector<16x128xf32>
    %32 = vector.broadcast %3 : vector<1x128xf32> to vector<16x128xf32>
    %33 = arith.mulf %31, %32 : vector<16x128xf32>
    %34 = vector.broadcast %4 : vector<1x128xf32> to vector<16x128xf32>
    %35 = arith.addf %33, %34 : vector<16x128xf32>
    %cst_10 = arith.constant 0.000000e+00 : f32
    %36 = vector.broadcast %cst_10 : f32 to vector<16x128xf32>
    %37 = arith.cmpf ogt, %35, %36 : vector<16x128xf32>
    %cst_11 = arith.constant 0.00999999977 : f32
    %38 = vector.broadcast %cst_11 : f32 to vector<16x128xf32>
    %39 = arith.mulf %38, %35 : vector<16x128xf32>
    %40 = arith.select %37, %35, %39 : vector<16x128xi1>, vector<16x128xf32>
    %c0_12 = arith.constant 0 : index
    %c0_13 = arith.constant 0 : index
    %41 = vector.load %arg3[%c0_12, %c0_13] : memref<128x64xf32, #tpu.memory_space<vmem>>, vector<128x64xf32>
    %cst_14 = arith.constant dense<0.000000e+00> : vector<16x64xf32>
    %42 = tpu.matmul %40, %41, %cst_14 {dimension_numbers = #tpu.dot_dimension_numbers<[1], [0], [0], [1], [0, 0, 1, 1], [], []>} : vector<16x128xf32>, vector<128x64xf32>, vector<16x64xf32> -> vector<16x64xf32>
    %43 = vector.broadcast %5 : vector<1x64xf32> to vector<16x64xf32>
    %44 = arith.addf %42, %43 : vector<16x64xf32>
    %cst_15 = arith.constant dense<0.000000e+00> : vector<16xf32>
    %45 = vector.multi_reduction <add>, %44, %cst_15 [1] : vector<16x64xf32> to vector<16xf32>
    %46 = vector.shape_cast %45 : vector<16xf32> to vector<16x1xf32>
    %47 = arith.mulf %44, %44 : vector<16x64xf32>
    %cst_16 = arith.constant dense<0.000000e+00> : vector<16xf32>
    %48 = vector.multi_reduction <add>, %47, %cst_16 [1] : vector<16x64xf32> to vector<16xf32>
    %49 = vector.shape_cast %48 : vector<16xf32> to vector<16x1xf32>
    %cst_17 = arith.constant 1.562500e-02 : f32
    %50 = vector.broadcast %cst_17 : f32 to vector<16x1xf32>
    %51 = arith.mulf %46, %50 : vector<16x1xf32>
    %cst_18 = arith.constant 1.562500e-02 : f32
    %52 = vector.broadcast %cst_18 : f32 to vector<16x1xf32>
    %53 = arith.mulf %49, %52 : vector<16x1xf32>
    %54 = arith.mulf %51, %51 : vector<16x1xf32>
    %55 = arith.subf %53, %54 : vector<16x1xf32>
    %56 = vector.broadcast %51 : vector<16x1xf32> to vector<16x64xf32>
    %57 = arith.subf %44, %56 : vector<16x64xf32>
    %cst_19 = arith.constant 9.99999974E-6 : f32
    %58 = vector.broadcast %cst_19 : f32 to vector<16x1xf32>
    %59 = arith.addf %55, %58 : vector<16x1xf32>
    %60 = math.rsqrt %59 : vector<16x1xf32>
    %61 = vector.broadcast %60 : vector<16x1xf32> to vector<16x64xf32>
    %62 = arith.mulf %57, %61 : vector<16x64xf32>
    %63 = vector.broadcast %6 : vector<1x64xf32> to vector<16x64xf32>
    %64 = arith.mulf %62, %63 : vector<16x64xf32>
    %65 = vector.broadcast %7 : vector<1x64xf32> to vector<16x64xf32>
    %66 = arith.addf %64, %65 : vector<16x64xf32>
    %cst_20 = arith.constant 0.000000e+00 : f32
    %67 = vector.broadcast %cst_20 : f32 to vector<16x64xf32>
    %68 = arith.cmpf ogt, %66, %67 : vector<16x64xf32>
    %cst_21 = arith.constant 0.00999999977 : f32
    %69 = vector.broadcast %cst_21 : f32 to vector<16x64xf32>
    %70 = arith.mulf %69, %66 : vector<16x64xf32>
    %71 = arith.select %68, %66, %70 : vector<16x64xi1>, vector<16x64xf32>
    %c0_22 = arith.constant 0 : index
    %c0_23 = arith.constant 0 : index
    %72 = vector.load %arg4[%c0_22, %c0_23] : memref<64x32xf32, #tpu.memory_space<vmem>>, vector<64x32xf32>
    %cst_24 = arith.constant dense<0.000000e+00> : vector<16x32xf32>
    %73 = tpu.matmul %71, %72, %cst_24 {dimension_numbers = #tpu.dot_dimension_numbers<[1], [0], [0], [1], [0, 0, 1, 1], [], []>} : vector<16x64xf32>, vector<64x32xf32>, vector<16x32xf32> -> vector<16x32xf32>
    %74 = vector.broadcast %8 : vector<1x32xf32> to vector<16x32xf32>
    %75 = arith.addf %73, %74 : vector<16x32xf32>
    %cst_25 = arith.constant 0.000000e+00 : f32
    %76 = vector.broadcast %cst_25 : f32 to vector<16x32xf32>
    %77 = arith.cmpf ogt, %75, %76 : vector<16x32xf32>
    %cst_26 = arith.constant 0.00999999977 : f32
    %78 = vector.broadcast %cst_26 : f32 to vector<16x32xf32>
    %79 = arith.mulf %78, %75 : vector<16x32xf32>
    %80 = arith.select %77, %75, %79 : vector<16x32xi1>, vector<16x32xf32>
    %c0_27 = arith.constant 0 : index
    %c0_28 = arith.constant 0 : index
    %81 = vector.load %arg5[%c0_27, %c0_28] : memref<32x8xf32, #tpu.memory_space<vmem>>, vector<32x8xf32>
    %cst_29 = arith.constant dense<0.000000e+00> : vector<16x8xf32>
    %82 = tpu.matmul %80, %81, %cst_29 {dimension_numbers = #tpu.dot_dimension_numbers<[1], [0], [0], [1], [0, 0, 1, 1], [], []>} : vector<16x32xf32>, vector<32x8xf32>, vector<16x8xf32> -> vector<16x8xf32>
    %83 = vector.broadcast %9 : vector<1x8xf32> to vector<16x8xf32>
    %84 = arith.addf %82, %83 : vector<16x8xf32>
    %c0_30 = arith.constant 0 : index
    %c0_31 = arith.constant 0 : index
    %85 = vector.load %arg7[%c0_30, %c0_31] : memref<16x8xf32, #tpu.memory_space<vmem>>, vector<16x8xf32>
    tpu.vector_store %arg7[%c0_30, %c0_31], %84 {strides = array<i32>} : memref<16x8xf32, #tpu.memory_space<vmem>>, vector<16x8xf32>,
    return
  }
  func.func @transform_0(%arg0: i32) -> (i32, i32) {
    %c0_i32 = arith.constant 0 : i32
    %c0_i32_0 = arith.constant 0 : i32
    return %arg0, %c0_i32 : i32, i32
  }
  func.func @transform_1(%arg0: i32) -> (i32, i32) {
    %c0_i32 = arith.constant 0 : i32
    %c0_i32_0 = arith.constant 0 : i32
    %c0_i32_1 = arith.constant 0 : i32
    return %c0_i32, %c0_i32_0 : i32, i32
  }
  func.func @transform_2(%arg0: i32) -> (i32, i32) {
    %c0_i32 = arith.constant 0 : i32
    %c0_i32_0 = arith.constant 0 : i32
    %c0_i32_1 = arith.constant 0 : i32
    return %c0_i32, %c0_i32_0 : i32, i32
  }
  func.func @transform_3(%arg0: i32) -> (i32, i32) {
    %c0_i32 = arith.constant 0 : i32
    %c0_i32_0 = arith.constant 0 : i32
    %c0_i32_1 = arith.constant 0 : i32
    return %c0_i32, %c0_i32_0 : i32, i32
  }
  func.func @transform_4(%arg0: i32) -> (i32, i32) {
    %c0_i32 = arith.constant 0 : i32
    %c0_i32_0 = arith.constant 0 : i32
    %c0_i32_1 = arith.constant 0 : i32
    return %c0_i32, %c0_i32_0 : i32, i32
  }
  func.func @transform_5(%arg0: i32) -> (i32, i32) {
    %c0_i32 = arith.constant 0 : i32
    %c0_i32_0 = arith.constant 0 : i32
    %c0_i32_1 = arith.constant 0 : i32
    return %c0_i32, %c0_i32_0 : i32, i32
  }
  func.func @transform_6(%arg0: i32) -> (i32, i32) {
    %c0_i32 = arith.constant 0 : i32
    %c0_i32_0 = arith.constant 0 : i32
    return %arg0, %c0_i32 : i32, i32
  }
}

</mosaic_0001>

<llo_original>
// kernel: tpu_custom_call.1
$region0: #{tpu_custom_call.1}
  #allocation0 [shape = 'u32[]', space=smem, size = 0x4, offset = 0x4, fixed_abs, tag = 'smem constant byte address 0x4 - core index']
  #allocation1 [shape = 'u32[144,128]{1,0:T(1,128)}', space=vmem, size = 0x12000, scoped, tag = 'internal scratch']
  %s0 = inlined_call_operand.vmem [shape: f32[16,40], index: 0, kind: input, shape index: {}]
  %s1 = inlined_call_operand.vmem [shape: f32[40,128], index: 1, kind: input, shape index: {}]
  %s2 = inlined_call_operand.vmem [shape: f32[128,64], index: 2, kind: input, shape index: {}]
  %s3 = inlined_call_operand.vmem [shape: f32[64,32], index: 3, kind: input, shape index: {}]
  %s4 = inlined_call_operand.vmem [shape: f32[32,8], index: 4, kind: input, shape index: {}]
  %s5 = inlined_call_operand.vmem [shape: f32[8,128], index: 5, kind: input, shape index: {}]
  %s6 = inlined_call_operand.vmem [shape: f32[16,8], index: 6, kind: output, shape index: {}]
  %s7 = sld [smem:[#allocation0]]
  $region34: #{tpu_custom_call.1} parent=0
    _
  %s9 = ssub.s32 1, %s7
  %s10 = scalar_select 0, %s9, %s7
  // Predicated region
  $region2: #{tpu_custom_call.1} parent=0 // pred_check
    _
  $region3: #{tpu_custom_call.1} parent=0 // pred_check_branch
    %12 = sbr.rel (0) target = $region5
  $region4: #{tpu_custom_call.1} parent=0 // pred_region
    _
  $region5: #{tpu_custom_call.1} parent=0 // pred_fallthru
    _
  // Predicated region
  $region6: #{tpu_custom_call.1} parent=0 // pred_check
    _
  $region7: #{tpu_custom_call.1} parent=0 // pred_check_branch
    %14 = sbr.rel (0) target = $region9
  $region8: #{tpu_custom_call.1} parent=0 // pred_region
    _
  $region9: #{tpu_custom_call.1} parent=0 // pred_fallthru
    _
  // Predicated region
  $region10: #{tpu_custom_call.1} parent=0 // pred_check
    _
  $region11: #{tpu_custom_call.1} parent=0 // pred_check_branch
    %16 = sbr.rel (0) target = $region13
  $region12: #{tpu_custom_call.1} parent=0 // pred_region
    _
  $region13: #{tpu_custom_call.1} parent=0 // pred_fallthru
    _
  // Predicated region
  $region14: #{tpu_custom_call.1} parent=0 // pred_check
    _
  $region15: #{tpu_custom_call.1} parent=0 // pred_check_branch
    %18 = sbr.rel (0) target = $region17
  $region16: #{tpu_custom_call.1} parent=0 // pred_region
    _
  $region17: #{tpu_custom_call.1} parent=0 // pred_fallthru
    _
  // Predicated region
  $region18: #{tpu_custom_call.1} parent=0 // pred_check
    _
  $region19: #{tpu_custom_call.1} parent=0 // pred_check_branch
    %20 = sbr.rel (0) target = $region21
  $region20: #{tpu_custom_call.1} parent=0 // pred_region
    _
  $region21: #{tpu_custom_call.1} parent=0 // pred_fallthru
    _
  // Predicated region
  $region22: #{tpu_custom_call.1} parent=0 // pred_check
    _
  $region23: #{tpu_custom_call.1} parent=0 // pred_check_branch
    %22 = sbr.rel (0) target = $region25
  $region24: #{tpu_custom_call.1} parent=0 // pred_region
    _
  $region25: #{tpu_custom_call.1} parent=0 // pred_fallthru
    _
  %v23 = vld [vmem:[%s0] sm:$0xff]
  %v24 = vld [vmem:[%s0 + $0x8] sm:$0xff]
  %v25 = vld [vmem:[%s5] sm:$0xff]
  %v26 = vld [vmem:[%s1] sm:$0xff]
  %v27 = vld [vmem:[%s1 + $0x8] sm:$0xff]
  %v28 = vld [vmem:[%s1 + $0x10] sm:$0xff]
  %v29 = vld [vmem:[%s1 + $0x18] sm:$0xff]
  %v30 = vld [vmem:[%s1 + $0x20] sm:$0xff]
  %v31 = vlaneseq
  %v32 = vshrl.u32 %v31, 7
  %v33 = vsub.s32 0, %v32
  %v34 = vrot.slane %v25, %v33
  %vm35 = vcmask 326656
  %v37 = vsel %vm35, %v23, 0
  %v40 = vsel %vm35, %v24, 0
  %42 = vmatprep.subr.mxu0 0.0
  %43 = vmatpush1.msra.mxu0 %v26
  %44 = vmatprep.subr.mxu0 0.0
  %45 = vmatpush1.msra.mxu0 %v27
  %46 = vmatprep.subr.mxu0 0.0
  %47 = vmatpush1.msra.mxu0 %v28
  %48 = vmatprep.subr.mxu0 0.0
  %49 = vmatpush1.msra.mxu0 %v29
  %50 = vmatprep.subr.mxu0 0.0
  %51 = vmatpush1.msra.mxu0 %v30
  %52 = vmatprep.subr.mxu0 0.0
  %53 = vmatpush1.msra.mxu0 0.0
  %54 = vmatprep.subr.mxu0 0.0
  %55 = vmatpush1.msra.mxu0 0.0
  %56 = vmatprep.subr.mxu0 0.0
  %57 = vmatpush1.msra.mxu0 0.0
  %58 = vmatprep.subr.mxu0 0.0
  %59 = vmatpush1.msra.mxu0 0.0
  %60 = vmatprep.subr.mxu0 0.0
  %61 = vmatpush1.msra.mxu0 0.0
  %62 = vmatprep.subr.mxu0 0.0
  %63 = vmatpush1.msra.mxu0 0.0
  %64 = vmatprep.subr.mxu0 0.0
  %65 = vmatpush1.msra.mxu0 0.0
  %66 = vmatprep.subr.mxu0 0.0
  %67 = vmatpush1.msra.mxu0 0.0
  %68 = vmatprep.subr.mxu0 0.0
  %69 = vmatpush1.msra.mxu0 0.0
  %70 = vmatprep.subr.mxu0 0.0
  %71 = vmatpush1.msra.mxu0 0.0
  %72 = vmatprep.subr.mxu0 0.0
  %73 = vmatpush1.msra.mxu0 0.0
  %74 = vmatprep.subr.mxu0 0.0
  %75 = vmatpush1.msra.mxu0 0.0
  %76 = vmatprep.subr.mxu0 0.0
  %77 = vmatpush1.msra.mxu0 0.0
  %78 = vmatprep.subr.mxu0 0.0
  %79 = vmatpush1.msra.mxu0 0.0
  %80 = vmatprep.subr.mxu0 0.0
  %81 = vmatpush1.msra.mxu0 0.0
  %82 = vmatprep.subr.mxu0 0.0
  %83 = vmatpush1.msra.mxu0 0.0
  %84 = vmatprep.subr.mxu0 0.0
  %85 = vmatpush1.msra.mxu0 0.0
  %86 = vmatprep.subr.mxu0 0.0
  %87 = vmatpush1.msra.mxu0 0.0
  %88 = vmatprep.subr.mxu0 0.0
  %89 = vmatpush1.msra.mxu0 0.0
  %90 = vmatprep.subr.mxu0 0.0
  %91 = vmatpush1.msra.mxu0 0.0
  %92 = vmatprep.subr.mxu0 0.0
  %93 = vmatpush1.msra.mxu0 0.0
  %94 = vmatprep.subr.mxu0 0.0
  %95 = vmatpush1.msra.mxu0 0.0
  %96 = vmatprep.subr.mxu0 0.0
  %97 = vmatpush1.msra.mxu0 0.0
  %98 = vmatprep.subr.mxu0 0.0
  %99 = vmatpush1.msra.mxu0 0.0
  %100 = vmatprep.subr.mxu0 0.0
  %101 = vmatpush1.msra.mxu0 0.0
  %102 = vmatprep.subr.mxu0 0.0
  %103 = vmatpush1.msra.mxu0 0.0
  %104 = vmatprep.subr.mxu0 0.0
  %105 = vmatpush1.msra.mxu0 0.0
  %106 = vmatprep.mubr.f32.mxu0 0.0
  %107 = vmatmul.mubr.f32.gmra.mrb[0].mxu0 %v37
  %v108 = vpop.f32.mrb[0].mxu0
  %v109 = vadd.f32 %v34, %v108
  %v110 = vpop.f32.mrb[0].mxu0
  %111 = vmatprep.mubr.f32.mxu0 0.0
  %112 = vmatmul.mubr.f32.gmra.mrb[0].mxu0 %v40
  %v113 = vpop.f32.mrb[0].mxu0
  %v114 = vadd.f32 %v34, %v113
  %v115 = vpop.f32.mrb[0].mxu0
  %116 = vdwg.mxu0
  %117 = vadd.xlane.f32.xlu0 %v109
  %v118 = vpop.xlane.xlu0 %117
  %119 = vadd.xlane.f32.xlu0 %v114
  %v120 = vpop.xlane.xlu0 %119
  %v121 = vmul.f32 %v109, %v109
  %v122 = vmul.f32 %v114, %v114
  %123 = vadd.xlane.f32.xlu0 %v121
  %v124 = vpop.xlane.xlu0 %123
  %125 = vadd.xlane.f32.xlu0 %v122
  %v126 = vpop.xlane.xlu0 %125
  %v127 = vmul.f32 %v118, 0.0078125
  %v128 = vmul.f32 %v120, 0.0078125
  %v129 = vmul.f32 %v124, 0.0078125
  %v130 = vmul.f32 %v126, 0.0078125
  %v131 = vmul.f32 %v127, %v127
  %v132 = vmul.f32 %v128, %v128
  %v133 = vsub.f32 %v129, %v131
  %v134 = vsub.f32 %v130, %v132
  %v135 = vsub.f32 %v109, %v127
  %v136 = vsub.f32 %v114, %v128
  %v137 = vadd.f32 %v133, 1e-05
  %v138 = vadd.f32 %v134, 1e-05
  %v139 = vrsqrt.pop %v137
  %v140 = vrsqrt.pop %v138
  %v141 = vmul.f32 %v135, %v139
  %v142 = vmul.f32 %v136, %v140
  %v143 = vlaneseq
  %v144 = vshrl.u32 %v143, 7
  %v145 = vsub.s32 1, %v144
  %v146 = vrot.slane %v25, %v145
  %v147 = vmul.f32 %v141, %v146
  %v148 = vmul.f32 %v142, %v146
  %v149 = vlaneseq
  %v150 = vshrl.u32 %v149, 7
  %v151 = vsub.s32 2, %v150
  %v152 = vrot.slane %v25, %v151
  %v153 = vadd.f32 %v147, %v152
  %v154 = vadd.f32 %v148, %v152
  %vm155 = vcmp.gt.f32.partialorder %v153, 0.0
  %vm156 = vcmp.gt.f32.partialorder %v154, 0.0
  %v157 = vmul.f32 %v153, 0.01
  %v158 = vmul.f32 %v154, 0.01
  %v159 = vsel %vm155, %v153, %v157
  %v160 = vsel %vm156, %v154, %v158
  %v161 = vld [vmem:[%s2] sm:$0xff]
  %v162 = vld [vmem:[%s2 + $0x8] sm:$0xff]
  %v163 = vld [vmem:[%s2 + $0x10] sm:$0xff]
  %v164 = vld [vmem:[%s2 + $0x18] sm:$0xff]
  %v165 = vld [vmem:[%s2 + $0x20] sm:$0xff]
  %v166 = vld [vmem:[%s2 + $0x28] sm:$0xff]
  %v167 = vld [vmem:[%s2 + $0x30] sm:$0xff]
  %v168 = vld [vmem:[%s2 + $0x38] sm:$0xff]
  %v169 = vld [vmem:[%s2 + $0x40] sm:$0xff]
  %v170 = vld [vmem:[%s2 + $0x48] sm:$0xff]
  %v171 = vld [vmem:[%s2 + $0x50] sm:$0xff]
  %v172 = vld [vmem:[%s2 + $0x58] sm:$0xff]
  %v173 = vld [vmem:[%s2 + $0x60] sm:$0xff]
  %v174 = vld [vmem:[%s2 + $0x68] sm:$0xff]
  %v175 = vld [vmem:[%s2 + $0x70] sm:$0xff]
  %v176 = vld [vmem:[%s2 + $0x78] sm:$0xff]
  %v177 = vlaneseq
  %v178 = vshrl.u32 %v177, 7
  %v179 = vsub.s32 3, %v178
  %v180 = vrot.slane %v25, %v179
  %181 = vmatprep.subr.mxu0 0.0
  %182 = vmatpush1.msra.mxu0 %v161
  %183 = vmatprep.subr.mxu0 0.0
  %184 = vmatpush1.msra.mxu0 %v162
  %185 = vmatprep.subr.mxu0 0.0
  %186 = vmatpush1.msra.mxu0 %v163
  %187 = vmatprep.subr.mxu0 0.0
  %188 = vmatpush1.msra.mxu0 %v164
  %189 = vmatprep.subr.mxu0 0.0
  %190 = vmatpush1.msra.mxu0 %v165
  %191 = vmatprep.subr.mxu0 0.0
  %192 = vmatpush1.msra.mxu0 %v166
  %193 = vmatprep.subr.mxu0 0.0
  %194 = vmatpush1.msra.mxu0 %v167
  %195 = vmatprep.subr.mxu0 0.0
  %196 = vmatpush1.msra.mxu0 %v168
  %197 = vmatprep.subr.mxu0 0.0
  %198 = vmatpush1.msra.mxu0 %v169
  %199 = vmatprep.subr.mxu0 0.0
  %200 = vmatpush1.msra.mxu0 %v170
  %201 = vmatprep.subr.mxu0 0.0
  %202 = vmatpush1.msra.mxu0 %v171
  %203 = vmatprep.subr.mxu0 0.0
  %204 = vmatpush1.msra.mxu0 %v172
  %205 = vmatprep.subr.mxu0 0.0
  %206 = vmatpush1.msra.mxu0 %v173
  %207 = vmatprep.subr.mxu0 0.0
  %208 = vmatpush1.msra.mxu0 %v174
  %209 = vmatprep.subr.mxu0 0.0
  %210 = vmatpush1.msra.mxu0 %v175
  %211 = vmatprep.subr.mxu0 0.0
  %212 = vmatpush1.msra.mxu0 %v176
  %213 = vmatprep.subr.mxu0 0.0
  %214 = vmatpush1.msra.mxu0 0.0
  %215 = vmatprep.subr.mxu0 0.0
  %216 = vmatpush1.msra.mxu0 0.0
  %217 = vmatprep.subr.mxu0 0.0
  %218 = vmatpush1.msra.mxu0 0.0
  %219 = vmatprep.subr.mxu0 0.0
  %220 = vmatpush1.msra.mxu0 0.0
  %221 = vmatprep.subr.mxu0 0.0
  %222 = vmatpush1.msra.mxu0 0.0
  %223 = vmatprep.subr.mxu0 0.0
  %224 = vmatpush1.msra.mxu0 0.0
  %225 = vmatprep.subr.mxu0 0.0
  %226 = vmatpush1.msra.mxu0 0.0
  %227 = vmatprep.subr.mxu0 0.0
  %228 = vmatpush1.msra.mxu0 0.0
  %229 = vmatprep.subr.mxu0 0.0
  %230 = vmatpush1.msra.mxu0 0.0
  %231 = vmatprep.subr.mxu0 0.0
  %232 = vmatpush1.msra.mxu0 0.0
  %233 = vmatprep.subr.mxu0 0.0
  %234 = vmatpush1.msra.mxu0 0.0
  %235 = vmatprep.subr.mxu0 0.0
  %236 = vmatpush1.msra.mxu0 0.0
  %237 = vmatprep.subr.mxu0 0.0
  %238 = vmatpush1.msra.mxu0 0.0
  %239 = vmatprep.subr.mxu0 0.0
  %240 = vmatpush1.msra.mxu0 0.0
  %241 = vmatprep.subr.mxu0 0.0
  %242 = vmatpush1.msra.mxu0 0.0
  %243 = vmatprep.subr.mxu0 0.0
  %244 = vmatpush1.msra.mxu0 0.0
  %245 = vmatprep.mubr.f32.mxu0 0.0
  %246 = vmatmul.mubr.f32.gmra.mrb[0].mxu0 %v159
  %v247 = vpop.f32.mrb[0].mxu0
  %v248 = vadd.f32 %v180, %v247
  %v249 = vpop.f32.mrb[0].mxu0
  %250 = vmatprep.mubr.f32.mxu0 0.0
  %251 = vmatmul.mubr.f32.gmra.mrb[0].mxu0 %v160
  %v252 = vpop.f32.mrb[0].mxu0
  %v253 = vadd.f32 %v180, %v252
  %v254 = vpop.f32.mrb[0].mxu0
  %255 = vdwg.mxu0
  %vm256 = vcmask 523264
  %v257 = vsel %vm256, %v248, 0.0
  %258 = vadd.xlane.f32.xlu0 %v257
  %v259 = vpop.xlane.xlu0 %258
  %v260 = vsel %vm256, %v253, 0.0
  %261 = vadd.xlane.f32.xlu0 %v260
  %v262 = vpop.xlane.xlu0 %261
  %v263 = vmul.f32 %v248, %v248
  %v264 = vmul.f32 %v253, %v253
  %v265 = vsel %vm256, %v263, 0.0
  %266 = vadd.xlane.f32.xlu0 %v265
  %v267 = vpop.xlane.xlu0 %266
  %v268 = vsel %vm256, %v264, 0.0
  %269 = vadd.xlane.f32.xlu0 %v268
  %v270 = vpop.xlane.xlu0 %269
  %v271 = vmul.f32 %v259, 0.015625
  %v272 = vmul.f32 %v262, 0.015625
  %v273 = vmul.f32 %v267, 0.015625
  %v274 = vmul.f32 %v270, 0.015625
  %v275 = vmul.f32 %v271, %v271
  %v276 = vmul.f32 %v272, %v272
  %v277 = vsub.f32 %v273, %v275
  %v278 = vsub.f32 %v274, %v276
  %v279 = vsub.f32 %v248, %v271
  %v280 = vsub.f32 %v253, %v272
  %v281 = vadd.f32 %v277, 1e-05
  %v282 = vadd.f32 %v278, 1e-05
  %v283 = vrsqrt.pop %v281
  %v284 = vrsqrt.pop %v282
  %v285 = vmul.f32 %v279, %v283
  %v286 = vmul.f32 %v280, %v284
  %v287 = vlaneseq
  %v288 = vshrl.u32 %v287, 7
  %v289 = vsub.s32 4, %v288
  %v290 = vrot.slane %v25, %v289
  %v291 = vmul.f32 %v285, %v290
  %v292 = vmul.f32 %v286, %v290
  %v293 = vlaneseq
  %v294 = vshrl.u32 %v293, 7
  %v295 = vsub.s32 5, %v294
  %v296 = vrot.slane %v25, %v295
  %v297 = vadd.f32 %v291, %v296
  %v298 = vadd.f32 %v292, %v296
  %vm299 = vcmp.gt.f32.partialorder %v297, 0.0
  %vm300 = vcmp.gt.f32.partialorder %v298, 0.0
  %v301 = vmul.f32 %v297, 0.01
  %v302 = vmul.f32 %v298, 0.01
  %v303 = vsel %vm299, %v297, %v301
  %v304 = vsel %vm300, %v298, %v302
  %v305 = vld [vmem:[%s3] sm:$0xff]
  %v306 = vld [vmem:[%s3 + $0x8] sm:$0xff]
  %v307 = vld [vmem:[%s3 + $0x10] sm:$0xff]
  %v308 = vld [vmem:[%s3 + $0x18] sm:$0xff]
  %v309 = vld [vmem:[%s3 + $0x20] sm:$0xff]
  %v310 = vld [vmem:[%s3 + $0x28] sm:$0xff]
  %v311 = vld [vmem:[%s3 + $0x30] sm:$0xff]
  %v312 = vld [vmem:[%s3 + $0x38] sm:$0xff]
  %v313 = vlaneseq
  %v314 = vshrl.u32 %v313, 7
  %v315 = vsub.s32 6, %v314
  %v316 = vrot.slane %v25, %v315
  %v318 = vsel %vm256, %v303, 0
  %v321 = vsel %vm256, %v304, 0
  %323 = vmatprep.subr.mxu0 0.0
  %324 = vmatpush1.msra.mxu0 %v305
  %325 = vmatprep.subr.mxu0 0.0
  %326 = vmatpush1.msra.mxu0 %v306
  %327 = vmatprep.subr.mxu0 0.0
  %328 = vmatpush1.msra.mxu0 %v307
  %329 = vmatprep.subr.mxu0 0.0
  %330 = vmatpush1.msra.mxu0 %v308
  %331 = vmatprep.subr.mxu0 0.0
  %332 = vmatpush1.msra.mxu0 %v309
  %333 = vmatprep.subr.mxu0 0.0
  %334 = vmatpush1.msra.mxu0 %v310
  %335 = vmatprep.subr.mxu0 0.0
  %336 = vmatpush1.msra.mxu0 %v311
  %337 = vmatprep.subr.mxu0 0.0
  %338 = vmatpush1.msra.mxu0 %v312
  %339 = vmatprep.subr.mxu0 0.0
  %340 = vmatpush1.msra.mxu0 0.0
  %341 = vmatprep.subr.mxu0 0.0
  %342 = vmatpush1.msra.mxu0 0.0
  %343 = vmatprep.subr.mxu0 0.0
  %344 = vmatpush1.msra.mxu0 0.0
  %345 = vmatprep.subr.mxu0 0.0
  %346 = vmatpush1.msra.mxu0 0.0
  %347 = vmatprep.subr.mxu0 0.0
  %348 = vmatpush1.msra.mxu0 0.0
  %349 = vmatprep.subr.mxu0 0.0
  %350 = vmatpush1.msra.mxu0 0.0
  %351 = vmatprep.subr.mxu0 0.0
  %352 = vmatpush1.msra.mxu0 0.0
  %353 = vmatprep.subr.mxu0 0.0
  %354 = vmatpush1.msra.mxu0 0.0
  %355 = vmatprep.subr.mxu0 0.0
  %356 = vmatpush1.msra.mxu0 0.0
  %357 = vmatprep.subr.mxu0 0.0
  %358 = vmatpush1.msra.mxu0 0.0
  %359 = vmatprep.subr.mxu0 0.0
  %360 = vmatpush1.msra.mxu0 0.0
  %361 = vmatprep.subr.mxu0 0.0
  %362 = vmatpush1.msra.mxu0 0.0
  %363 = vmatprep.subr.mxu0 0.0
  %364 = vmatpush1.msra.mxu0 0.0
  %365 = vmatprep.subr.mxu0 0.0
  %366 = vmatpush1.msra.mxu0 0.0
  %367 = vmatprep.subr.mxu0 0.0
  %368 = vmatpush1.msra.mxu0 0.0
  %369 = vmatprep.subr.mxu0 0.0
  %370 = vmatpush1.msra.mxu0 0.0
  %371 = vmatprep.subr.mxu0 0.0
  %372 = vmatpush1.msra.mxu0 0.0
  %373 = vmatprep.subr.mxu0 0.0
  %374 = vmatpush1.msra.mxu0 0.0
  %375 = vmatprep.subr.mxu0 0.0
  %376 = vmatpush1.msra.mxu0 0.0
  %377 = vmatprep.subr.mxu0 0.0
  %378 = vmatpush1.msra.mxu0 0.0
  %379 = vmatprep.subr.mxu0 0.0
  %380 = vmatpush1.msra.mxu0 0.0
  %381 = vmatprep.subr.mxu0 0.0
  %382 = vmatpush1.msra.mxu0 0.0
  %383 = vmatprep.subr.mxu0 0.0
  %384 = vmatpush1.msra.mxu0 0.0
  %385 = vmatprep.subr.mxu0 0.0
  %386 = vmatpush1.msra.mxu0 0.0
  %387 = vmatprep.mubr.f32.mxu0 0.0
  %388 = vmatmul.mubr.f32.gmra.mrb[0].mxu0 %v318
  %v389 = vpop.f32.mrb[0].mxu0
  %v390 = vadd.f32 %v316, %v389
  %v391 = vpop.f32.mrb[0].mxu0
  %392 = vmatprep.mubr.f32.mxu0 0.0
  %393 = vmatmul.mubr.f32.gmra.mrb[0].mxu0 %v321
  %v394 = vpop.f32.mrb[0].mxu0
  %v395 = vadd.f32 %v316, %v394
  %v396 = vpop.f32.mrb[0].mxu0
  %397 = vdwg.mxu0
  %vm398 = vcmp.gt.f32.partialorder %v390, 0.0
  %vm399 = vcmp.gt.f32.partialorder %v395, 0.0
  %v400 = vmul.f32 %v390, 0.01
  %v401 = vmul.f32 %v395, 0.01
  %v402 = vsel %vm398, %v390, %v400
  %v403 = vsel %vm399, %v395, %v401
  %v404 = vld [vmem:[%s4] sm:$0xff]
  %v405 = vld [vmem:[%s4 + $0x8] sm:$0xff]
  %v406 = vld [vmem:[%s4 + $0x10] sm:$0xff]
  %v407 = vld [vmem:[%s4 + $0x18] sm:$0xff]
  %v408 = vlaneseq
  %v409 = vshrl.u32 %v408, 7
  %v410 = vsub.s32 7, %v409
  %v411 = vrot.slane %v25, %v410
  %vm412 = vcmask 261120
  %v414 = vsel %vm412, %v402, 0
  %v417 = vsel %vm412, %v403, 0
  %419 = vmatprep.subr.mxu0 0.0
  %420 = vmatpush1.msra.mxu0 %v404
  %421 = vmatprep.subr.mxu0 0.0
  %422 = vmatpush1.msra.mxu0 %v405
  %423 = vmatprep.subr.mxu0 0.0
  %424 = vmatpush1.msra.mxu0 %v406
  %425 = vmatprep.subr.mxu0 0.0
  %426 = vmatpush1.msra.mxu0 %v407
  %427 = vmatprep.subr.mxu0 0.0
  %428 = vmatpush1.msra.mxu0 0.0
  %429 = vmatprep.subr.mxu0 0.0
  %430 = vmatpush1.msra.mxu0 0.0
  %431 = vmatprep.subr.mxu0 0.0
  %432 = vmatpush1.msra.mxu0 0.0
  %433 = vmatprep.subr.mxu0 0.0
  %434 = vmatpush1.msra.mxu0 0.0
  %435 = vmatprep.subr.mxu0 0.0
  %436 = vmatpush1.msra.mxu0 0.0
  %437 = vmatprep.subr.mxu0 0.0
  %438 = vmatpush1.msra.mxu0 0.0
  %439 = vmatprep.subr.mxu0 0.0
  %440 = vmatpush1.msra.mxu0 0.0
  %441 = vmatprep.subr.mxu0 0.0
  %442 = vmatpush1.msra.mxu0 0.0
  %443 = vmatprep.subr.mxu0 0.0
  %444 = vmatpush1.msra.mxu0 0.0
  %445 = vmatprep.subr.mxu0 0.0
  %446 = vmatpush1.msra.mxu0 0.0
  %447 = vmatprep.subr.mxu0 0.0
  %448 = vmatpush1.msra.mxu0 0.0
  %449 = vmatprep.subr.mxu0 0.0
  %450 = vmatpush1.msra.mxu0 0.0
  %451 = vmatprep.subr.mxu0 0.0
  %452 = vmatpush1.msra.mxu0 0.0
  %453 = vmatprep.subr.mxu0 0.0
  %454 = vmatpush1.msra.mxu0 0.0
  %455 = vmatprep.subr.mxu0 0.0
  %456 = vmatpush1.msra.mxu0 0.0
  %457 = vmatprep.subr.mxu0 0.0
  %458 = vmatpush1.msra.mxu0 0.0
  %459 = vmatprep.subr.mxu0 0.0
  %460 = vmatpush1.msra.mxu0 0.0
  %461 = vmatprep.subr.mxu0 0.0
  %462 = vmatpush1.msra.mxu0 0.0
  %463 = vmatprep.subr.mxu0 0.0
  %464 = vmatpush1.msra.mxu0 0.0
  %465 = vmatprep.subr.mxu0 0.0
  %466 = vmatpush1.msra.mxu0 0.0
  %467 = vmatprep.subr.mxu0 0.0
  %468 = vmatpush1.msra.mxu0 0.0
  %469 = vmatprep.subr.mxu0 0.0
  %470 = vmatpush1.msra.mxu0 0.0
  %471 = vmatprep.subr.mxu0 0.0
  %472 = vmatpush1.msra.mxu0 0.0
  %473 = vmatprep.subr.mxu0 0.0
  %474 = vmatpush1.msra.mxu0 0.0
  %475 = vmatprep.subr.mxu0 0.0
  %476 = vmatpush1.msra.mxu0 0.0
  %477 = vmatprep.subr.mxu0 0.0
  %478 = vmatpush1.msra.mxu0 0.0
  %479 = vmatprep.subr.mxu0 0.0
  %480 = vmatpush1.msra.mxu0 0.0
  %481 = vmatprep.subr.mxu0 0.0
  %482 = vmatpush1.msra.mxu0 0.0
  %483 = vmatprep.mubr.f32.mxu0 0.0
  %484 = vmatmul.mubr.f32.gmra.mrb[0].mxu0 %v414
  %v485 = vpop.f32.mrb[0].mxu0
  %v486 = vadd.f32 %v411, %v485
  %v487 = vpop.f32.mrb[0].mxu0
  %488 = vmatprep.mubr.f32.mxu0 0.0
  %489 = vmatmul.mubr.f32.gmra.mrb[0].mxu0 %v417
  %v490 = vpop.f32.mrb[0].mxu0
  %v491 = vadd.f32 %v411, %v490
  %v492 = vpop.f32.mrb[0].mxu0
  %493 = vdwg.mxu0
  %vm494 = vcmask 64512
  %495 = vst.msk [vmem:[%s6] sm:$0xff] %vm494, %v486
  %496 = vst.msk [vmem:[%s6 + $0x8] sm:$0xff] %vm494, %v491
  // Predicated region
  $region26: #{tpu_custom_call.1} parent=0 // pred_check
    _
  $region27: #{tpu_custom_call.1} parent=0 // pred_check_branch
    %498 = sbr.rel (0) target = $region29
  $region28: #{tpu_custom_call.1} parent=0 // pred_region
    _
  $region29: #{tpu_custom_call.1} parent=0 // pred_fallthru
    _
  // Predicated region
  $region30: #{tpu_custom_call.1} parent=0 // pred_check
    _
  $region31: #{tpu_custom_call.1} parent=0 // pred_check_branch
    %500 = sbr.rel (0) target = $region33
  $region32: #{tpu_custom_call.1} parent=0 // pred_region
    _
  $region33: #{tpu_custom_call.1} parent=0 // pred_fallthru
    _

</llo_original>
